<compile_context>
chip_gen: v6e
topology: v6e:2x2x1
jax: 0.10.0
libtpu: 0.0.40
codegen_flags: <defaults>
</compile_context>

<pallas_src>
import math
from functools import partial

import jax
import jax.numpy as jnp
import numpy as np
from jax.experimental import pallas as pl
from jax.experimental.pallas import tpu as pltpu


def _round_up(x, m):
    return (x + m - 1) // m * m


def qmodel_kernel(state_ref, action_ref,
                  w1_ref, b1_ref, w2_ref, b2_ref,
                  wh_ref, bh_ref,
                  qhat_ref, *, nb_action):
    """One batch tile: 2-layer relu MLP + fused dueling head + masked sum.

    Matmuls use whatever dtype the weights are in (f32 or bf16) and
    accumulate in f32 on the MXU; all element-wise math stays f32.
    """
    # dense1 + relu
    h = jnp.dot(state_ref[...], w1_ref[...], preferred_element_type=jnp.float32)
    h = jnp.maximum(h + b1_ref[...], 0.0)                                # (TB, 64) f32

    # dense2 + relu
    h = jnp.dot(h.astype(w2_ref.dtype), w2_ref[...],
                preferred_element_type=jnp.float32)
    h = jnp.maximum(h + b2_ref[...], 0.0)                                # (TB, 32) f32

    # fused dueling head: columns [0, A) = advantage, column A = value
    y = jnp.dot(h.astype(wh_ref.dtype), wh_ref[...],
                preferred_element_type=jnp.float32) + bh_ref[...]        # (TB, A+1)

    adv = y[:, :nb_action]                                               # (TB, A)
    col = jax.lax.broadcasted_iota(jnp.int32, y.shape, 1)
    v = jnp.sum(jnp.where(col == nb_action, y, 0.0),
                axis=-1, keepdims=True)                                  # (TB, 1)
    adv_mean = jnp.mean(adv, axis=-1, keepdims=True)                     # (TB, 1)

    # q_hat = sum((adv + v - mean) * action)  ==  sum(adv*action) + (v - mean)*sum(action)
    # (exact for any mask; avoids broadcasting q_val to (TB, A))
    act = action_ref[...].astype(jnp.float32)                            # (TB, A)
    adv_dot = jnp.sum(adv * act, axis=-1, keepdims=True)
    act_sum = jnp.sum(act, axis=-1, keepdims=True)
    qhat_ref[...] = adv_dot + (v - adv_mean) * act_sum                   # (TB, 1)


def qmodel_forward(state, action, params, *, tb=256):
    """Dueling-QModel forward. state: (B, S), action: (B, A) mask. Returns (B, 1) f32."""
    B, S = state.shape
    A = action.shape[-1]

    # Batch tile size: as large as sensible (amortizes ~0.35us/grid-step),
    # multiple of 8 sublanes, capped at the padded batch.
    tb = max(8, min(_round_up(tb, 8), _round_up(B, 8)))
    B_pad = _round_up(B, tb)
    if B_pad != B:
        pad = B_pad - B
        state = jnp.pad(state, ((0, pad), (0, 0)))
        action = jnp.pad(action, ((0, pad), (0, 0)))

    # Fuse the 1-wide value head into the advantage head: one (32, A+1) matmul.
    wh = jnp.concatenate([params["wa"], params["wv"]], axis=1)           # (32, A+1)
    bh = jnp.concatenate([params["ba"], params["bv"]], axis=1)           # (1, A+1)

    grid = (B_pad // tb,)
    batch_spec = lambda cols: pl.BlockSpec((tb, cols), lambda i: (i, 0))
    resident = lambda shape: pl.BlockSpec(shape, lambda i: (0, 0))       # VMEM-resident weights

    w_bytes = (S * 64 + 64 * 32 + 32 * (A + 1)) * params["w1"].dtype.itemsize
    cost = pl.CostEstimate(
        flops=2 * B_pad * (S * 64 + 64 * 32 + 32 * (A + 1)),
        transcendentals=0,
        bytes_accessed=int(B_pad * (S + A) * state.dtype.itemsize        # activations in
                           + B_pad * 4                                   # (B, 1) f32 out
                           + w_bytes
                           + (64 + 32 + A + 1) * 4))                     # biases (f32)

    out = pl.pallas_call(
        partial(qmodel_kernel, nb_action=A),
        out_shape=jax.ShapeDtypeStruct((B_pad, 1), jnp.float32),
        grid=grid,
        in_specs=[
            batch_spec(S),                       # state tile   (TB, S)
            batch_spec(A),                       # action tile  (TB, A)
            resident((S, 64)), resident((1, 64)),
            resident((64, 32)), resident((1, 32)),
            resident((32, A + 1)), resident((1, A + 1)),
        ],
        out_specs=batch_spec(1),
        compiler_params=pltpu.CompilerParams(
            dimension_semantics=("parallel",)),  # megacore: split batch tiles across TCs
        cost_estimate=cost,
    )(state, action,
      params["w1"], params["b1"], params["w2"], params["b2"], wh, bh)

    return out[:B]


def xavier_normal(key, fan_in, fan_out, dtype=jnp.float32):
    """torch.nn.init.xavier_normal_ equivalent; returned in (in, out) layout."""
    std = math.sqrt(2.0 / (fan_in + fan_out))
    return (std * jax.random.normal(key, (fan_in, fan_out))).astype(dtype)


def init_params(key, state_space, nb_action):
    k1, k2, k3, k4 = jax.random.split(key, 4)
    return {
        "w1": xavier_normal(k1, state_space, 64),
        "b1": jnp.zeros((1, 64), jnp.float32),
        "w2": xavier_normal(k2, 64, 32),
        "b2": jnp.zeros((1, 32), jnp.float32),
        "wa": xavier_normal(k3, 32, nb_action),
        "ba": jnp.zeros((1, nb_action), jnp.float32),
        "wv": xavier_normal(k4, 32, 1),
        "bv": jnp.zeros((1, 1), jnp.float32),
    }


def qmodel_forward_ref(state, action, params):
    """Plain-JAX reference mirroring the PyTorch dueling forward."""
    x = jnp.maximum(state @ params["w1"] + params["b1"], 0.0)
    x = jnp.maximum(x @ params["w2"] + params["b2"], 0.0)
    adv = x @ params["wa"] + params["ba"]
    v = x @ params["wv"] + params["bv"]
    q = adv + v - jnp.mean(adv, axis=1, keepdims=True)
    return jnp.sum(q * action, axis=-1, keepdims=True)


if __name__ == "__main__":
    B, state_space, nb_action = 256, 16, 4

    key = jax.random.PRNGKey(0)
    kp, ks, ka = jax.random.split(key, 3)

    params = init_params(kp, state_space, nb_action)
    state = jax.random.normal(ks, (B, state_space), jnp.float32)
    # one-hot action mask (gather the chosen action's Q value)
    act_idx = jax.random.randint(ka, (B,), 0, nb_action)
    action = jax.nn.one_hot(act_idx, nb_action, dtype=jnp.float32)

    q_ref = qmodel_forward_ref(state, action, params)

    # f32 path: exact match with the reference; tb=128 -> two grid tiles.
    q_f32 = jax.block_until_ready(qmodel_forward(state, action, params, tb=128))
    np.testing.assert_allclose(np.asarray(q_f32), np.asarray(q_ref),
                               rtol=1e-5, atol=1e-5)

    # bf16 matmul-operand path (v6e/v7x HBM-traffic feedback): bf16 weights +
    # inputs, f32 MXU accumulation, f32 element-wise (v5e-safe).
    params_bf16 = {k: (v.astype(jnp.bfloat16) if k.startswith("w") else v)
                   for k, v in params.items()}
    q_bf16 = jax.block_until_ready(
        qmodel_forward(state.astype(jnp.bfloat16),
                       action.astype(jnp.bfloat16),
                       params_bf16, tb=128))
    np.testing.assert_allclose(np.asarray(q_bf16), np.asarray(q_ref),
                               rtol=5e-2, atol=5e-2)

    print("KERNEL_OK")
</pallas_src>

<mosaic_0001>
module attributes {stable_mosaic.version = 11 : i64} {
  func.func @qmodel_kernel(%arg0: i32, %arg1: memref<128x16xf32, #tpu.memory_space<vmem>>, %arg2: memref<128x4xf32, #tpu.memory_space<vmem>>, %arg3: memref<16x64xf32, #tpu.memory_space<vmem>>, %arg4: memref<1x64xf32, #tpu.memory_space<vmem>>, %arg5: memref<64x32xf32, #tpu.memory_space<vmem>>, %arg6: memref<1x32xf32, #tpu.memory_space<vmem>>, %arg7: memref<32x5xf32, #tpu.memory_space<vmem>>, %arg8: memref<1x5xf32, #tpu.memory_space<vmem>>, %arg9: memref<128x1xf32, #tpu.memory_space<vmem>>) attributes {dimension_semantics = [#tpu.dimension_semantics<parallel>], iteration_bounds = array<i64: 2>, scalar_prefetch = 0 : i64, scratch_operands = 0 : i64, tpu.core_type = #tpu.core_type<tc>, window_params = [{transform_indices = @transform_0, window_bounds = array<i64: 128, 16>}, {transform_indices = @transform_1, window_bounds = array<i64: 128, 4>}, {pipeline_mode = #tpu.pipeline_mode<synchronous>, transform_indices = @transform_2, window_bounds = array<i64: 16, 64>}, {pipeline_mode = #tpu.pipeline_mode<synchronous>, transform_indices = @transform_3, window_bounds = array<i64: 1, 64>}, {pipeline_mode = #tpu.pipeline_mode<synchronous>, transform_indices = @transform_4, window_bounds = array<i64: 64, 32>}, {pipeline_mode = #tpu.pipeline_mode<synchronous>, transform_indices = @transform_5, window_bounds = array<i64: 1, 32>}, {pipeline_mode = #tpu.pipeline_mode<synchronous>, transform_indices = @transform_6, window_bounds = array<i64: 32, 5>}, {pipeline_mode = #tpu.pipeline_mode<synchronous>, transform_indices = @transform_7, window_bounds = array<i64: 1, 5>}, {transform_indices = @transform_8, window_bounds = array<i64: 128, 1>}]} {
    %c0 = arith.constant 0 : index
    %c0_0 = arith.constant 0 : index
    %0 = vector.load %arg1[%c0, %c0_0] : memref<128x16xf32, #tpu.memory_space<vmem>>, vector<128x16xf32>
    %c0_1 = arith.constant 0 : index
    %c0_2 = arith.constant 0 : index
    %1 = vector.load %arg3[%c0_1, %c0_2] : memref<16x64xf32, #tpu.memory_space<vmem>>, vector<16x64xf32>
    %cst = arith.constant dense<0.000000e+00> : vector<128x64xf32>
    %2 = tpu.matmul %0, %1, %cst {dimension_numbers = #tpu.dot_dimension_numbers<[1], [0], [0], [1], [0, 0, 1, 1], [], []>} : vector<128x16xf32>, vector<16x64xf32>, vector<128x64xf32> -> vector<128x64xf32>
    %c0_3 = arith.constant 0 : index
    %c0_4 = arith.constant 0 : index
    %3 = vector.load %arg4[%c0_3, %c0_4] : memref<1x64xf32, #tpu.memory_space<vmem>>, vector<1x64xf32>
    %4 = vector.broadcast %3 : vector<1x64xf32> to vector<128x64xf32>
    %5 = arith.addf %2, %4 : vector<128x64xf32>
    %cst_5 = arith.constant 0.000000e+00 : f32
    %6 = vector.broadcast %cst_5 : f32 to vector<128x64xf32>
    %7 = arith.maximumf %5, %6 : vector<128x64xf32>
    %c0_6 = arith.constant 0 : index
    %c0_7 = arith.constant 0 : index
    %8 = vector.load %arg5[%c0_6, %c0_7] : memref<64x32xf32, #tpu.memory_space<vmem>>, vector<64x32xf32>
    %cst_8 = arith.constant dense<0.000000e+00> : vector<128x32xf32>
    %9 = tpu.matmul %7, %8, %cst_8 {dimension_numbers = #tpu.dot_dimension_numbers<[1], [0], [0], [1], [0, 0, 1, 1], [], []>} : vector<128x64xf32>, vector<64x32xf32>, vector<128x32xf32> -> vector<128x32xf32>
    %c0_9 = arith.constant 0 : index
    %c0_10 = arith.constant 0 : index
    %10 = vector.load %arg6[%c0_9, %c0_10] : memref<1x32xf32, #tpu.memory_space<vmem>>, vector<1x32xf32>
    %11 = vector.broadcast %10 : vector<1x32xf32> to vector<128x32xf32>
    %12 = arith.addf %9, %11 : vector<128x32xf32>
    %cst_11 = arith.constant 0.000000e+00 : f32
    %13 = vector.broadcast %cst_11 : f32 to vector<128x32xf32>
    %14 = arith.maximumf %12, %13 : vector<128x32xf32>
    %c0_12 = arith.constant 0 : index
    %c0_13 = arith.constant 0 : index
    %15 = vector.load %arg7[%c0_12, %c0_13] : memref<32x5xf32, #tpu.memory_space<vmem>>, vector<32x5xf32>
    %cst_14 = arith.constant dense<0.000000e+00> : vector<128x5xf32>
    %16 = tpu.matmul %14, %15, %cst_14 {dimension_numbers = #tpu.dot_dimension_numbers<[1], [0], [0], [1], [0, 0, 1, 1], [], []>} : vector<128x32xf32>, vector<32x5xf32>, vector<128x5xf32> -> vector<128x5xf32>
    %c0_15 = arith.constant 0 : index
    %c0_16 = arith.constant 0 : index
    %17 = vector.load %arg8[%c0_15, %c0_16] : memref<1x5xf32, #tpu.memory_space<vmem>>, vector<1x5xf32>
    %18 = vector.broadcast %17 : vector<1x5xf32> to vector<128x5xf32>
    %19 = arith.addf %16, %18 : vector<128x5xf32>
    %20 = vector.extract_strided_slice %19 {offsets = [0, 0], sizes = [128, 4], strides = [1, 1]} : vector<128x5xf32> to vector<128x4xf32>
    %21 = tpu.iota {dimensions = array<i32: 1>} : vector<128x5xi32>
    %c4_i32 = arith.constant 4 : i32
    %22 = vector.broadcast %c4_i32 : i32 to vector<128x5xi32>
    %23 = arith.cmpi eq, %21, %22 : vector<128x5xi32>
    %cst_17 = arith.constant 0.000000e+00 : f32
    %24 = vector.broadcast %cst_17 : f32 to vector<128x5xf32>
    %25 = arith.select %23, %19, %24 : vector<128x5xi1>, vector<128x5xf32>
    %cst_18 = arith.constant dense<0.000000e+00> : vector<128xf32>
    %26 = vector.multi_reduction <add>, %25, %cst_18 [1] : vector<128x5xf32> to vector<128xf32>
    %27 = vector.shape_cast %26 : vector<128xf32> to vector<128x1xf32>
    %cst_19 = arith.constant dense<0.000000e+00> : vector<128xf32>
    %28 = vector.multi_reduction <add>, %20, %cst_19 [1] : vector<128x4xf32> to vector<128xf32>
    %29 = vector.shape_cast %28 : vector<128xf32> to vector<128x1xf32>
    %cst_20 = arith.constant 4.000000e+00 : f32
    %30 = vector.broadcast %cst_20 : f32 to vector<128x1xf32>
    %31 = arith.divf %29, %30 : vector<128x1xf32>
    %c0_21 = arith.constant 0 : index
    %c0_22 = arith.constant 0 : index
    %32 = vector.load %arg2[%c0_21, %c0_22] : memref<128x4xf32, #tpu.memory_space<vmem>>, vector<128x4xf32>
    %33 = arith.mulf %20, %32 : vector<128x4xf32>
    %cst_23 = arith.constant dense<0.000000e+00> : vector<128xf32>
    %34 = vector.multi_reduction <add>, %33, %cst_23 [1] : vector<128x4xf32> to vector<128xf32>
    %35 = vector.shape_cast %34 : vector<128xf32> to vector<128x1xf32>
    %cst_24 = arith.constant dense<0.000000e+00> : vector<128xf32>
    %36 = vector.multi_reduction <add>, %32, %cst_24 [1] : vector<128x4xf32> to vector<128xf32>
    %37 = vector.shape_cast %36 : vector<128xf32> to vector<128x1xf32>
    %38 = arith.subf %27, %31 : vector<128x1xf32>
    %39 = arith.mulf %38, %37 : vector<128x1xf32>
    %40 = arith.addf %35, %39 : vector<128x1xf32>
    %c0_25 = arith.constant 0 : index
    %c0_26 = arith.constant 0 : index
    %41 = vector.load %arg9[%c0_25, %c0_26] : memref<128x1xf32, #tpu.memory_space<vmem>>, vector<128x1xf32>
    tpu.vector_store %arg9[%c0_25, %c0_26], %40 {strides = array<i32>} : memref<128x1xf32, #tpu.memory_space<vmem>>, vector<128x1xf32>,
    return
  }
  func.func @transform_0(%arg0: i32) -> (i32, i32) {
    %c0_i32 = arith.constant 0 : i32
    %c0_i32_0 = arith.constant 0 : i32
    return %arg0, %c0_i32 : i32, i32
  }
  func.func @transform_1(%arg0: i32) -> (i32, i32) {
    %c0_i32 = arith.constant 0 : i32
    %c0_i32_0 = arith.constant 0 : i32
    return %arg0, %c0_i32 : i32, i32
  }
  func.func @transform_2(%arg0: i32) -> (i32, i32) {
    %c0_i32 = arith.constant 0 : i32
    %c0_i32_0 = arith.constant 0 : i32
    %c0_i32_1 = arith.constant 0 : i32
    return %c0_i32, %c0_i32_0 : i32, i32
  }
  func.func @transform_3(%arg0: i32) -> (i32, i32) {
    %c0_i32 = arith.constant 0 : i32
    %c0_i32_0 = arith.constant 0 : i32
    %c0_i32_1 = arith.constant 0 : i32
    return %c0_i32, %c0_i32_0 : i32, i32
  }
  func.func @transform_4(%arg0: i32) -> (i32, i32) {
    %c0_i32 = arith.constant 0 : i32
    %c0_i32_0 = arith.constant 0 : i32
    %c0_i32_1 = arith.constant 0 : i32
    return %c0_i32, %c0_i32_0 : i32, i32
  }
  func.func @transform_5(%arg0: i32) -> (i32, i32) {
    %c0_i32 = arith.constant 0 : i32
    %c0_i32_0 = arith.constant 0 : i32
    %c0_i32_1 = arith.constant 0 : i32
    return %c0_i32, %c0_i32_0 : i32, i32
  }
  func.func @transform_6(%arg0: i32) -> (i32, i32) {
    %c0_i32 = arith.constant 0 : i32
    %c0_i32_0 = arith.constant 0 : i32
    %c0_i32_1 = arith.constant 0 : i32
    return %c0_i32, %c0_i32_0 : i32, i32
  }
  func.func @transform_7(%arg0: i32) -> (i32, i32) {
    %c0_i32 = arith.constant 0 : i32
    %c0_i32_0 = arith.constant 0 : i32
    %c0_i32_1 = arith.constant 0 : i32
    return %c0_i32, %c0_i32_0 : i32, i32
  }
  func.func @transform_8(%arg0: i32) -> (i32, i32) {
    %c0_i32 = arith.constant 0 : i32
    %c0_i32_0 = arith.constant 0 : i32
    return %arg0, %c0_i32 : i32, i32
  }
}

</mosaic_0001>

<llo_original>
// kernel: tpu_custom_call.1
$region0: #{tpu_custom_call.1}
  #allocation0 [shape = 'u32[]', space=smem, size = 0x4, offset = 0x4, fixed_abs, tag = 'smem constant byte address 0x4 - core index']
  #allocation1 [shape = 'u32[144,128]{1,0:T(1,128)}', space=vmem, size = 0x12000, scoped, tag = 'internal scratch']
  %s0 = inlined_call_operand.vmem [shape: f32[256,16], index: 0, kind: input, shape index: {}]
  %s1 = inlined_call_operand.vmem [shape: f32[256,4], index: 1, kind: input, shape index: {}]
  %s2 = inlined_call_operand.vmem [shape: f32[16,64], index: 2, kind: input, shape index: {}]
  %s3 = inlined_call_operand.vmem [shape: f32[1,64], index: 3, kind: input, shape index: {}]
  %s4 = inlined_call_operand.vmem [shape: f32[64,32], index: 4, kind: input, shape index: {}]
  %s5 = inlined_call_operand.vmem [shape: f32[1,32], index: 5, kind: input, shape index: {}]
  %s6 = inlined_call_operand.vmem [shape: f32[32,5], index: 6, kind: input, shape index: {}]
  %s7 = inlined_call_operand.vmem [shape: f32[1,5], index: 7, kind: input, shape index: {}]
  %s8 = inlined_call_operand.vmem [shape: f32[256,1], index: 8, kind: output, shape index: {}]
  %s9 = sld [smem:[#allocation0]]
  $region65: #{tpu_custom_call.1} parent=0
    _
  %s11 = ssub.s32 1, %s9
  %s12 = scalar_select 0, %s11, %s9
  loop: start=0, step=1, limit=4
  $region2: #{tpu_custom_call.1} parent=0 // loop_pre_header
    _
  $region3: #{tpu_custom_call.1} parent=0 // loop_header
    %s14 = sphi 0, %s18
    %p15 = scmp.ge.s32.totalorder %s14, 4
    %s24 = sphi 0, %s26
    %s27 = sphi 0, %s24
    %s28 = sphi 0, %s27
    %s44 = sphi 0, %s28
    %s50 = sphi 0, %s52
    %s53 = sphi 0, %s50
    %s54 = sphi 0, %s53
    %s70 = sphi 0, %s54
    %s74 = sphi 0, %s74
    %s76 = sphi 0, %s74
    %s77 = sphi 0, %s76
    %s91 = sphi 0, %s77
    %s95 = sphi 0, %s95
    %s97 = sphi 0, %s95
    %s98 = sphi 0, %s97
    %s112 = sphi 0, %s98
    %s116 = sphi 0, %s116
    %s118 = sphi 0, %s116
    %s119 = sphi 0, %s118
    %s133 = sphi 0, %s119
    %s137 = sphi 0, %s137
    %s139 = sphi 0, %s137
    %s140 = sphi 0, %s139
    %s154 = sphi 0, %s140
    %s158 = sphi 0, %s158
    %s160 = sphi 0, %s158
    %s161 = sphi 0, %s160
    %s175 = sphi 0, %s161
    %s179 = sphi 0, %s179
    %s181 = sphi 0, %s179
    %s182 = sphi 0, %s181
    %s196 = sphi 0, %s182
    %s202 = sphi 0, %s204
    %s205 = sphi 0, %s202
    %s206 = sphi 0, %s205
    %s222 = sphi 0, %s206
  $region4: #{tpu_custom_call.1} parent=0 // loop_header_branch
    %17 = sbr.rel (%p15) target = $region8
  $region5: #{tpu_custom_call.1} parent=0 // loop_body
    %s19 = ssub.s32 %s14, 1
    %s20 = ssub.s32 %s14, 2
    %s21 = sadd.s32 %s14, 1
    %s22 = ssub.s32 %s14, %s21
    %p23 = scmp.eq.s32.totalorder %s22, 0
    %s25 = sadd.s32 %s24, 1
    %s26 = scalar_select %p23, %s24, %s25
    %p29 = pneg %p23
    %p30 = scmp.eq.s32.totalorder %s14, 1
    %p31 = por %p29, %p30
    %p32 = scmp.ne.s32.totalorder %s24, %s27
    %p33 = scmp.eq.s32.totalorder %s14, 0
    %p34 = por %p32, %p33
    %p35 = scmp.ne.s32.totalorder %s24, %s27
    %p36 = scmp.eq.s32.totalorder %s19, 1
    %p37 = por %p35, %p36
    %p38 = scmp.ne.s32.totalorder %s27, %s28
    %p39 = scmp.eq.s32.totalorder %s19, 0
    %p40 = por %p38, %p39
    %p41 = scmp.ne.s32.totalorder %s27, %s28
    %p42 = scmp.eq.s32.totalorder %s20, 1
    %p43 = por %p41, %p42
    %p45 = scmp.ne.s32.totalorder %s28, %s44
    %p46 = scmp.eq.s32.totalorder %s20, 0
    %p47 = por %p45, %p46
    %s48 = ssub.s32 %s14, %s21
    %p49 = scmp.eq.s32.totalorder %s48, 0
    %s51 = sadd.s32 %s50, 1
    %s52 = scalar_select %p49, %s50, %s51
    %p55 = pneg %p49
    %p56 = scmp.eq.s32.totalorder %s14, 1
    %p57 = por %p55, %p56
    %p58 = scmp.ne.s32.totalorder %s50, %s53
    %p59 = scmp.eq.s32.totalorder %s14, 0
    %p60 = por %p58, %p59
    %p61 = scmp.ne.s32.totalorder %s50, %s53
    %p62 = scmp.eq.s32.totalorder %s19, 1
    %p63 = por %p61, %p62
    %p64 = scmp.ne.s32.totalorder %s53, %s54
    %p65 = scmp.eq.s32.totalorder %s19, 0
    %p66 = por %p64, %p65
    %p67 = scmp.ne.s32.totalorder %s53, %s54
    %p68 = scmp.eq.s32.totalorder %s20, 1
    %p69 = por %p67, %p68
    %p71 = scmp.ne.s32.totalorder %s54, %s70
    %p72 = scmp.eq.s32.totalorder %s20, 0
    %p73 = por %p71, %p72
    %s75 = sadd.s32 %s74, 1
    %p78 = scmp.eq.s32.totalorder %s14, 1
    %p79 = scmp.ne.s32.totalorder %s74, %s76
    %p80 = scmp.eq.s32.totalorder %s14, 0
    %p81 = por %p79, %p80
    %p82 = scmp.ne.s32.totalorder %s74, %s76
    %p83 = scmp.eq.s32.totalorder %s19, 1
    %p84 = por %p82, %p83
    %p85 = scmp.ne.s32.totalorder %s76, %s77
    %p86 = scmp.eq.s32.totalorder %s19, 0
    %p87 = por %p85, %p86
    %p88 = scmp.ne.s32.totalorder %s76, %s77
    %p89 = scmp.eq.s32.totalorder %s20, 1
    %p90 = por %p88, %p89
    %p92 = scmp.ne.s32.totalorder %s77, %s91
    %p93 = scmp.eq.s32.totalorder %s20, 0
    %p94 = por %p92, %p93
    %s96 = sadd.s32 %s95, 1
    %p99 = scmp.eq.s32.totalorder %s14, 1
    %p100 = scmp.ne.s32.totalorder %s95, %s97
    %p101 = scmp.eq.s32.totalorder %s14, 0
    %p102 = por %p100, %p101
    %p103 = scmp.ne.s32.totalorder %s95, %s97
    %p104 = scmp.eq.s32.totalorder %s19, 1
    %p105 = por %p103, %p104
    %p106 = scmp.ne.s32.totalorder %s97, %s98
    %p107 = scmp.eq.s32.totalorder %s19, 0
    %p108 = por %p106, %p107
    %p109 = scmp.ne.s32.totalorder %s97, %s98
    %p110 = scmp.eq.s32.totalorder %s20, 1
    %p111 = por %p109, %p110
    %p113 = scmp.ne.s32.totalorder %s98, %s112
    %p114 = scmp.eq.s32.totalorder %s20, 0
    %p115 = por %p113, %p114
    %s117 = sadd.s32 %s116, 1
    %p120 = scmp.eq.s32.totalorder %s14, 1
    %p121 = scmp.ne.s32.totalorder %s116, %s118
    %p122 = scmp.eq.s32.totalorder %s14, 0
    %p123 = por %p121, %p122
    %p124 = scmp.ne.s32.totalorder %s116, %s118
    %p125 = scmp.eq.s32.totalorder %s19, 1
    %p126 = por %p124, %p125
    %p127 = scmp.ne.s32.totalorder %s118, %s119
    %p128 = scmp.eq.s32.totalorder %s19, 0
    %p129 = por %p127, %p128
    %p130 = scmp.ne.s32.totalorder %s118, %s119
    %p131 = scmp.eq.s32.totalorder %s20, 1
    %p132 = por %p130, %p131
    %p134 = scmp.ne.s32.totalorder %s119, %s133
    %p135 = scmp.eq.s32.totalorder %s20, 0
    %p136 = por %p134, %p135
    %s138 = sadd.s32 %s137, 1
    %p141 = scmp.eq.s32.totalorder %s14, 1
    %p142 = scmp.ne.s32.totalorder %s137, %s139
    %p143 = scmp.eq.s32.totalorder %s14, 0
    %p144 = por %p142, %p143
    %p145 = scmp.ne.s32.totalorder %s137, %s139
    %p146 = scmp.eq.s32.totalorder %s19, 1
    %p147 = por %p145, %p146
    %p148 = scmp.ne.s32.totalorder %s139, %s140
    %p149 = scmp.eq.s32.totalorder %s19, 0
    %p150 = por %p148, %p149
    %p151 = scmp.ne.s32.totalorder %s139, %s140
    %p152 = scmp.eq.s32.totalorder %s20, 1
    %p153 = por %p151, %p152
    %p155 = scmp.ne.s32.totalorder %s140, %s154
    %p156 = scmp.eq.s32.totalorder %s20, 0
    %p157 = por %p155, %p156
    %s159 = sadd.s32 %s158, 1
    %p162 = scmp.eq.s32.totalorder %s14, 1
    %p163 = scmp.ne.s32.totalorder %s158, %s160
    %p164 = scmp.eq.s32.totalorder %s14, 0
    %p165 = por %p163, %p164
    %p166 = scmp.ne.s32.totalorder %s158, %s160
    %p167 = scmp.eq.s32.totalorder %s19, 1
    %p168 = por %p166, %p167
    %p169 = scmp.ne.s32.totalorder %s160, %s161
    %p170 = scmp.eq.s32.totalorder %s19, 0
    %p171 = por %p169, %p170
    %p172 = scmp.ne.s32.totalorder %s160, %s161
    %p173 = scmp.eq.s32.totalorder %s20, 1
    %p174 = por %p172, %p173
    %p176 = scmp.ne.s32.totalorder %s161, %s175
    %p177 = scmp.eq.s32.totalorder %s20, 0
    %p178 = por %p176, %p177
    %s180 = sadd.s32 %s179, 1
    %p183 = scmp.eq.s32.totalorder %s14, 1
    %p184 = scmp.ne.s32.totalorder %s179, %s181
    %p185 = scmp.eq.s32.totalorder %s14, 0
    %p186 = por %p184, %p185
    %p187 = scmp.ne.s32.totalorder %s179, %s181
    %p188 = scmp.eq.s32.totalorder %s19, 1
    %p189 = por %p187, %p188
    %p190 = scmp.ne.s32.totalorder %s181, %s182
    %p191 = scmp.eq.s32.totalorder %s19, 0
    %p192 = por %p190, %p191
    %p193 = scmp.ne.s32.totalorder %s181, %s182
    %p194 = scmp.eq.s32.totalorder %s20, 1
    %p195 = por %p193, %p194
    %p197 = scmp.ne.s32.totalorder %s182, %s196
    %p198 = scmp.eq.s32.totalorder %s20, 0
    %p199 = por %p197, %p198
    %s200 = ssub.s32 %s14, %s21
    %p201 = scmp.eq.s32.totalorder %s200, 0
    %s203 = sadd.s32 %s202, 1
    %s204 = scalar_select %p201, %s202, %s203
    %p207 = pneg %p201
    %p208 = scmp.eq.s32.totalorder %s14, 1
    %p209 = por %p207, %p208
    %p210 = scmp.ne.s32.totalorder %s202, %s205
    %p211 = scmp.eq.s32.totalorder %s14, 0
    %p212 = por %p210, %p211
    %p213 = scmp.ne.s32.totalorder %s202, %s205
    %p214 = scmp.eq.s32.totalorder %s19, 1
    %p215 = por %p213, %p214
    %p216 = scmp.ne.s32.totalorder %s205, %s206
    %p217 = scmp.eq.s32.totalorder %s19, 0
    %p218 = por %p216, %p217
    %p219 = scmp.ne.s32.totalorder %s205, %s206
    %p220 = scmp.eq.s32.totalorder %s20, 1
    %p221 = por %p219, %p220
    %p223 = scmp.ne.s32.totalorder %s206, %s222
    %p224 = scmp.eq.s32.totalorder %s20, 0
    %p225 = por %p223, %p224
    %p226 = scmp.le.s32.totalorder 1, %s14
    %p227 = scmp.lt.s32.totalorder %s14, 3
    %p228 = pnand %p226, %p227
    %p229 = pneg %p228
    // Predicated region
    $region9: #{tpu_custom_call.1} parent=5 // pred_check
      _
    $region10: #{tpu_custom_call.1} parent=5 // pred_check_branch
      %231 = sbr.rel (%p228) target = $region12
    $region11: #{tpu_custom_call.1} parent=5 // pred_region
      %s232 = ssub.s32 %s14, 1
      // Predicated region
      $region13: #{tpu_custom_call.1} parent=11 // pred_check
        %p233 = pneg %p87
      $region14: #{tpu_custom_call.1} parent=11 // pred_check_branch
        %235 = sbr.rel (%p233) target = $region16
      $region15: #{tpu_custom_call.1} parent=11 // pred_region
        _
      $region16: #{tpu_custom_call.1} parent=11 // pred_fallthru
        _
      // Predicated region
      $region17: #{tpu_custom_call.1} parent=11 // pred_check
        %p236 = pneg %p108
      $region18: #{tpu_custom_call.1} parent=11 // pred_check_branch
        %238 = sbr.rel (%p236) target = $region20
      $region19: #{tpu_custom_call.1} parent=11 // pred_region
        _
      $region20: #{tpu_custom_call.1} parent=11 // pred_fallthru
        _
      // Predicated region
      $region21: #{tpu_custom_call.1} parent=11 // pred_check
        %p239 = pneg %p129
      $region22: #{tpu_custom_call.1} parent=11 // pred_check_branch
        %241 = sbr.rel (%p239) target = $region24
      $region23: #{tpu_custom_call.1} parent=11 // pred_region
        _
      $region24: #{tpu_custom_call.1} parent=11 // pred_fallthru
        _
      // Predicated region
      $region25: #{tpu_custom_call.1} parent=11 // pred_check
        %p242 = pneg %p150
      $region26: #{tpu_custom_call.1} parent=11 // pred_check_branch
        %244 = sbr.rel (%p242) target = $region28
      $region27: #{tpu_custom_call.1} parent=11 // pred_region
        _
      $region28: #{tpu_custom_call.1} parent=11 // pred_fallthru
        _
      // Predicated region
      $region29: #{tpu_custom_call.1} parent=11 // pred_check
        %p245 = pneg %p171
      $region30: #{tpu_custom_call.1} parent=11 // pred_check_branch
        %247 = sbr.rel (%p245) target = $region32
      $region31: #{tpu_custom_call.1} parent=11 // pred_region
        _
      $region32: #{tpu_custom_call.1} parent=11 // pred_fallthru
        _
      // Predicated region
      $region33: #{tpu_custom_call.1} parent=11 // pred_check
        %p248 = pneg %p192
      $region34: #{tpu_custom_call.1} parent=11 // pred_check_branch
        %250 = sbr.rel (%p248) target = $region36
      $region35: #{tpu_custom_call.1} parent=11 // pred_region
        _
      $region36: #{tpu_custom_call.1} parent=11 // pred_fallthru
        _
    $region12: #{tpu_custom_call.1} parent=5 // pred_fallthru
      _
    %p251 = scmp.lt.s32.totalorder %s14, 2
    // Predicated region
    $region37: #{tpu_custom_call.1} parent=5 // pred_check
      %p252 = pneg %p251
    $region38: #{tpu_custom_call.1} parent=5 // pred_check_branch
      %254 = sbr.rel (%p252) target = $region40
    $region39: #{tpu_custom_call.1} parent=5 // pred_region
      // Predicated region
      $region41: #{tpu_custom_call.1} parent=39 // pred_check
        %p255 = pneg %p34
      $region42: #{tpu_custom_call.1} parent=39 // pred_check_branch
        %257 = sbr.rel (%p255) target = $region44
      $region43: #{tpu_custom_call.1} parent=39 // pred_region
        %s258 = smul.u32 16, %s14
        %p259 = scmp.lt.s32.totalorder %s258, 31
        %s260 = scalar_select %p259, %s258, 31
        %s261 = smul.addr %s260, 8
        %s262 = scalar_lea.vmem %s0, %s261
        %s263 = smul.u32 16, %s14
      $region44: #{tpu_custom_call.1} parent=39 // pred_fallthru
        _
      // Predicated region
      $region45: #{tpu_custom_call.1} parent=39 // pred_check
        %p264 = pneg %p60
      $region46: #{tpu_custom_call.1} parent=39 // pred_check_branch
        %266 = sbr.rel (%p264) target = $region48
      $region47: #{tpu_custom_call.1} parent=39 // pred_region
        %s267 = smul.u32 16, %s14
        %p268 = scmp.lt.s32.totalorder %s267, 31
        %s269 = scalar_select %p268, %s267, 31
        %s270 = smul.addr %s269, 8
        %s271 = scalar_lea.vmem %s1, %s270
        %s272 = smul.u32 16, %s14
      $region48: #{tpu_custom_call.1} parent=39 // pred_fallthru
        _
    $region40: #{tpu_custom_call.1} parent=5 // pred_fallthru
      _
    %p273 = scmp.le.s32.totalorder 1, %s14
    %p274 = scmp.lt.s32.totalorder %s14, 3
    %p275 = pnand %p273, %p274
    %p276 = pneg %p275
    // Predicated region
    $region49: #{tpu_custom_call.1} parent=5 // pred_check
      _
    $region50: #{tpu_custom_call.1} parent=5 // pred_check_branch
      %278 = sbr.rel (%p275) target = $region52
    $region51: #{tpu_custom_call.1} parent=5 // pred_region
      %s279 = ssub.s32 %s14, 1
      %s280 = smul.u32 16, %s19
      %p281 = scmp.lt.s32.totalorder %s280, 31
      %s282 = scalar_select %p281, %s280, 31
      %s283 = smul.addr %s282, 8
      %s284 = scalar_lea.vmem %s0, %s283
      %p285 = pneg %p40
      %p286 = pneg %p37
      %s287 = smul.u32 16, %s19
      %p288 = scmp.lt.s32.totalorder %s287, 31
      %s289 = scalar_select %p288, %s287, 31
      %s290 = smul.addr %s289, 8
      %s291 = scalar_lea.vmem %s1, %s290
      %p292 = pneg %p66
      %p293 = pneg %p63
      %p294 = pneg %p87
      %p295 = pneg %p84
      %p296 = pneg %p108
      %p297 = pneg %p105
      %p298 = pneg %p129
      %p299 = pneg %p126
      %p300 = pneg %p150
      %p301 = pneg %p147
      %p302 = pneg %p171
      %p303 = pneg %p168
      %p304 = pneg %p192
      %p305 = pneg %p189
      %p306 = pneg %p218
      %p307 = pneg %p215
      %s308 = smul.u32 16, %s19
      %p309 = scmp.lt.s32.totalorder %s308, 31
      %s310 = scalar_select %p309, %s308, 31
      %s311 = smul.addr %s310, 8
      %s312 = scalar_lea.vmem %s8, %s311
      %s313 = smul.u32 16, %s19
      %p314 = scmp.lt.s32.totalorder %s313, 31
      %s315 = scalar_select %p314, %s313, 31
      %s316 = smul.addr %s315, 8
      %s317 = scalar_lea.vmem %s0, %s316
      %s318 = smul.u32 16, %s19
      %s319 = smul.u32 16, %s19
      %p320 = scmp.lt.s32.totalorder %s319, 31
      %s321 = scalar_select %p320, %s319, 31
      %s322 = smul.addr %s321, 8
      %s323 = scalar_lea.vmem %s1, %s322
      %s324 = smul.u32 16, %s19
      %s325 = smul.u32 16, %s19
      %p326 = scmp.lt.s32.totalorder %s325, 31
      %s327 = scalar_select %p326, %s325, 31
      %s328 = smul.addr %s327, 8
      %s329 = scalar_lea.vmem %s8, %s328
      %s330 = smul.u32 16, %s19
      %v331 = vld [vmem:[%s317] sm:$0xff]
      %v332 = vld [vmem:[%s317 + $0x8] sm:$0xff]
      %v333 = vld [vmem:[%s317 + $0x10] sm:$0xff]
      %v334 = vld [vmem:[%s317 + $0x18] sm:$0xff]
      %v335 = vld [vmem:[%s317 + $0x20] sm:$0xff]
      %v336 = vld [vmem:[%s317 + $0x28] sm:$0xff]
      %v337 = vld [vmem:[%s317 + $0x30] sm:$0xff]
      %v338 = vld [vmem:[%s317 + $0x38] sm:$0xff]
      %v339 = vld [vmem:[%s317 + $0x40] sm:$0xff]
      %v340 = vld [vmem:[%s317 + $0x48] sm:$0xff]
      %v341 = vld [vmem:[%s317 + $0x50] sm:$0xff]
      %v342 = vld [vmem:[%s317 + $0x58] sm:$0xff]
      %v343 = vld [vmem:[%s317 + $0x60] sm:$0xff]
      %v344 = vld [vmem:[%s317 + $0x68] sm:$0xff]
      %v345 = vld [vmem:[%s317 + $0x70] sm:$0xff]
      %v346 = vld [vmem:[%s317 + $0x78] sm:$0xff]
      %v347 = vld [vmem:[%s2] sm:$0xff]
      %v348 = vld [vmem:[%s2 + $0x8] sm:$0xff]
      %v349 = vld [vmem:[%s3] sm:$0x1]
      %v351 = vlaneseq
      %v352 = vshrl.u32 %v351, 7
      %v353 = vsub.s32 0, %v352
      %v354 = vrot.slane %v349, %v353
      %vm356 = vcmask 130048
      %v358 = vsel %vm356, %v331, 0
      %v361 = vsel %vm356, %v332, 0
      %v364 = vsel %vm356, %v333, 0
      %v367 = vsel %vm356, %v334, 0
      %v370 = vsel %vm356, %v335, 0
      %v373 = vsel %vm356, %v336, 0
      %v376 = vsel %vm356, %v337, 0
      %v379 = vsel %vm356, %v338, 0
      %v382 = vsel %vm356, %v339, 0
      %v385 = vsel %vm356, %v340, 0
      %v388 = vsel %vm356, %v341, 0
      %v391 = vsel %vm356, %v342, 0
      %v394 = vsel %vm356, %v343, 0
      %v397 = vsel %vm356, %v344, 0
      %v400 = vsel %vm356, %v345, 0
      %v403 = vsel %vm356, %v346, 0
      %405 = vmatprep.subr.mxu0 0.0
      %406 = vmatpush1.msra.mxu0 0.0
      %407 = vmatprep.subr.mxu0 0.0
      %408 = vmatpush1.msra.mxu0 0.0
      %409 = vmatprep.subr.mxu0 0.0
      %410 = vmatpush1.msra.mxu0 0.0
      %411 = vmatprep.subr.mxu0 0.0
      %412 = vmatpush1.msra.mxu0 0.0
      %413 = vmatprep.subr.mxu0 0.0
      %414 = vmatpush1.msra.mxu0 0.0
      %415 = vmatprep.subr.mxu0 0.0
      %416 = vmatpush1.msra.mxu0 0.0
      %417 = vmatprep.subr.mxu0 0.0
      %418 = vmatpush1.msra.mxu0 0.0
      %419 = vmatprep.subr.mxu0 0.0
      %420 = vmatpush1.msra.mxu0 0.0
      %421 = vmatprep.subr.mxu0 0.0
      %422 = vmatpush1.msra.mxu0 0.0
      %423 = vmatprep.subr.mxu0 0.0
      %424 = vmatpush1.msra.mxu0 0.0
      %425 = vmatprep.subr.mxu0 0.0
      %426 = vmatpush1.msra.mxu0 0.0
      %427 = vmatprep.subr.mxu0 0.0
      %428 = vmatpush1.msra.mxu0 0.0
      %429 = vmatprep.subr.mxu0 0.0
      %430 = vmatpush1.msra.mxu0 0.0
      %431 = vmatprep.subr.mxu0 0.0
      %432 = vmatpush1.msra.mxu0 0.0
      %433 = vmatprep.subr.mxu0 0.0
      %434 = vmatpush1.msra.mxu0 %v348
      %435 = vmatprep.subr.mxu0 0.0
      %436 = vmatpush1.msra.mxu0 %v347
      %437 = vmatprep.subr.mxu0 0.0
      %438 = vmatpush2.msra.mxu0 0.0
      %439 = vmatprep.subr.mxu0 0.0
      %440 = vmatpush2.msra.mxu0 0.0
      %441 = vmatprep.subr.mxu0 0.0
      %442 = vmatpush2.msra.mxu0 0.0
      %443 = vmatprep.subr.mxu0 0.0
      %444 = vmatpush2.msra.mxu0 0.0
      %445 = vmatprep.subr.mxu0 0.0
      %446 = vmatpush2.msra.mxu0 0.0
      %447 = vmatprep.subr.mxu0 0.0
      %448 = vmatpush2.msra.mxu0 0.0
      %449 = vmatprep.subr.mxu0 0.0
      %450 = vmatpush2.msra.mxu0 0.0
      %451 = vmatprep.subr.mxu0 0.0
      %452 = vmatpush2.msra.mxu0 0.0
      %453 = vmatprep.subr.mxu0 0.0
      %454 = vmatpush2.msra.mxu0 0.0
      %455 = vmatprep.subr.mxu0 0.0
      %456 = vmatpush2.msra.mxu0 0.0
      %457 = vmatprep.subr.mxu0 0.0
      %458 = vmatpush2.msra.mxu0 0.0
      %459 = vmatprep.subr.mxu0 0.0
      %460 = vmatpush2.msra.mxu0 0.0
      %461 = vmatprep.subr.mxu0 0.0
      %462 = vmatpush2.msra.mxu0 0.0
      %463 = vmatprep.subr.mxu0 0.0
      %464 = vmatpush2.msra.mxu0 0.0
      %465 = vmatprep.subr.mxu0 0.0
      %466 = vmatpush2.msra.mxu0 0.0
      %467 = vmatprep.subr.mxu0 0.0
      %468 = vmatpush2.msra.mxu0 0.0
      %469 = vmatprep.mubr.f32.mxu0 0.0
      %470 = vmatmul.mubr.f32.gmra.mxu0 %v358
      %v471 = vpop.f32.mrf.mxu0
      %v472 = vadd.f32 %v354, %v471
      %v473 = vpop.f32.mrf.mxu0
      %474 = vmatprep.mubr.f32.mxu0 0.0
      %475 = vmatmul.mubr.f32.gmra.mxu0 %v361
      %v476 = vpop.f32.mrf.mxu0
      %v477 = vadd.f32 %v354, %v476
      %v478 = vpop.f32.mrf.mxu0
      %479 = vmatprep.mubr.f32.mxu0 0.0
      %480 = vmatmul.mubr.f32.gmra.mxu0 %v364
      %v481 = vpop.f32.mrf.mxu0
      %v482 = vadd.f32 %v354, %v481
      %v483 = vpop.f32.mrf.mxu0
      %484 = vmatprep.mubr.f32.mxu0 0.0
      %485 = vmatmul.mubr.f32.gmra.mxu0 %v367
      %v486 = vpop.f32.mrf.mxu0
      %v487 = vadd.f32 %v354, %v486
      %v488 = vpop.f32.mrf.mxu0
      %489 = vmatprep.mubr.f32.mxu0 0.0
      %490 = vmatmul.mubr.f32.gmra.mxu0 %v370
      %v491 = vpop.f32.mrf.mxu0
      %v492 = vadd.f32 %v354, %v491
      %v493 = vpop.f32.mrf.mxu0
      %494 = vmatprep.mubr.f32.mxu0 0.0
      %495 = vmatmul.mubr.f32.gmra.mxu0 %v373
      %v496 = vpop.f32.mrf.mxu0
      %v497 = vadd.f32 %v354, %v496
      %v498 = vpop.f32.mrf.mxu0
      %499 = vmatprep.mubr.f32.mxu0 0.0
      %500 = vmatmul.mubr.f32.gmra.mxu0 %v376
      %v501 = vpop.f32.mrf.mxu0
      %v502 = vadd.f32 %v354, %v501
      %v503 = vpop.f32.mrf.mxu0
      %504 = vmatprep.mubr.f32.mxu0 0.0
      %505 = vmatmul.mubr.f32.gmra.mxu0 %v379
      %v506 = vpop.f32.mrf.mxu0
      %v507 = vadd.f32 %v354, %v506
      %v508 = vpop.f32.mrf.mxu0
      %509 = vmatprep.mubr.f32.mxu0 0.0
      %510 = vmatmul.mubr.f32.gmra.mxu0 %v382
      %v511 = vpop.f32.mrf.mxu0
      %v512 = vadd.f32 %v354, %v511
      %v513 = vpop.f32.mrf.mxu0
      %514 = vmatprep.mubr.f32.mxu0 0.0
      %515 = vmatmul.mubr.f32.gmra.mxu0 %v385
      %v516 = vpop.f32.mrf.mxu0
      %v517 = vadd.f32 %v354, %v516
      %v518 = vpop.f32.mrf.mxu0
      %519 = vmatprep.mubr.f32.mxu0 0.0
      %520 = vmatmul.mubr.f32.gmra.mxu0 %v388
      %v521 = vpop.f32.mrf.mxu0
      %v522 = vadd.f32 %v354, %v521
      %v523 = vpop.f32.mrf.mxu0
      %524 = vmatprep.mubr.f32.mxu0 0.0
      %525 = vmatmul.mubr.f32.gmra.mxu0 %v391
      %v526 = vpop.f32.mrf.mxu0
      %v527 = vadd.f32 %v354, %v526
      %v528 = vpop.f32.mrf.mxu0
      %529 = vmatprep.mubr.f32.mxu0 0.0
      %530 = vmatmul.mubr.f32.gmra.mxu0 %v394
      %v531 = vpop.f32.mrf.mxu0
      %v532 = vadd.f32 %v354, %v531
      %v533 = vpop.f32.mrf.mxu0
      %534 = vmatprep.mubr.f32.mxu0 0.0
      %535 = vmatmul.mubr.f32.gmra.mxu0 %v397
      %v536 = vpop.f32.mrf.mxu0
      %v537 = vadd.f32 %v354, %v536
      %v538 = vpop.f32.mrf.mxu0
      %539 = vmatprep.mubr.f32.mxu0 0.0
      %540 = vmatmul.mubr.f32.gmra.mxu0 %v400
      %v541 = vpop.f32.mrf.mxu0
      %v542 = vadd.f32 %v354, %v541
      %v543 = vpop.f32.mrf.mxu0
      %544 = vmatprep.mubr.f32.mxu0 0.0
      %545 = vmatmul.mubr.f32.gmra.mxu0 %v403
      %v546 = vpop.f32.mrf.mxu0
      %v547 = vadd.f32 %v354, %v546
      %v548 = vpop.f32.mrf.mxu0
      %549 = vdwg.mxu0
      %v550 = vmax.f32 %v472, 0.0
      %v551 = vmax.f32 %v477, 0.0
      %v552 = vmax.f32 %v482, 0.0
      %v553 = vmax.f32 %v487, 0.0
      %v554 = vmax.f32 %v492, 0.0
      %v555 = vmax.f32 %v497, 0.0
      %v556 = vmax.f32 %v502, 0.0
      %v557 = vmax.f32 %v507, 0.0
      %v558 = vmax.f32 %v512, 0.0
      %v559 = vmax.f32 %v517, 0.0
      %v560 = vmax.f32 %v522, 0.0
      %v561 = vmax.f32 %v527, 0.0
      %v562 = vmax.f32 %v532, 0.0
      %v563 = vmax.f32 %v537, 0.0
      %v564 = vmax.f32 %v542, 0.0
      %v565 = vmax.f32 %v547, 0.0
      %v566 = vld [vmem:[%s4] sm:$0xff]
      %v567 = vld [vmem:[%s4 + $0x8] sm:$0xff]
      %v568 = vld [vmem:[%s4 + $0x10] sm:$0xff]
      %v569 = vld [vmem:[%s4 + $0x18] sm:$0xff]
      %v570 = vld [vmem:[%s4 + $0x20] sm:$0xff]
      %v571 = vld [vmem:[%s4 + $0x28] sm:$0xff]
      %v572 = vld [vmem:[%s4 + $0x30] sm:$0xff]
      %v573 = vld [vmem:[%s4 + $0x38] sm:$0xff]
      %v574 = vld [vmem:[%s5] sm:$0x1]
      %v576 = vlaneseq
      %v577 = vshrl.u32 %v576, 7
      %v578 = vsub.s32 0, %v577
      %v579 = vrot.slane %v574, %v578
      %vm581 = vcmask 523264
      %v583 = vsel %vm581, %v550, 0
      %v586 = vsel %vm581, %v551, 0
      %v589 = vsel %vm581, %v552, 0
      %v592 = vsel %vm581, %v553, 0
      %v595 = vsel %vm581, %v554, 0
      %v598 = vsel %vm581, %v555, 0
      %v601 = vsel %vm581, %v556, 0
      %v604 = vsel %vm581, %v557, 0
      %v607 = vsel %vm581, %v558, 0
      %v610 = vsel %vm581, %v559, 0
      %v613 = vsel %vm581, %v560, 0
      %v616 = vsel %vm581, %v561, 0
      %v619 = vsel %vm581, %v562, 0
      %v622 = vsel %vm581, %v563, 0
      %v625 = vsel %vm581, %v564, 0
      %v628 = vsel %vm581, %v565, 0
      %630 = vmatprep.subr.mxu0 0.0
      %631 = vmatpush1.msra.mxu0 0.0
      %632 = vmatprep.subr.mxu0 0.0
      %633 = vmatpush1.msra.mxu0 0.0
      %634 = vmatprep.subr.mxu0 0.0
      %635 = vmatpush1.msra.mxu0 0.0
      %636 = vmatprep.subr.mxu0 0.0
      %637 = vmatpush1.msra.mxu0 0.0
      %638 = vmatprep.subr.mxu0 0.0
      %639 = vmatpush1.msra.mxu0 0.0
      %640 = vmatprep.subr.mxu0 0.0
      %641 = vmatpush1.msra.mxu0 0.0
      %642 = vmatprep.subr.mxu0 0.0
      %643 = vmatpush1.msra.mxu0 0.0
      %644 = vmatprep.subr.mxu0 0.0
      %645 = vmatpush1.msra.mxu0 0.0
      %646 = vmatprep.subr.mxu0 0.0
      %647 = vmatpush1.msra.mxu0 %v573
      %648 = vmatprep.subr.mxu0 0.0
      %649 = vmatpush1.msra.mxu0 %v572
      %650 = vmatprep.subr.mxu0 0.0
      %651 = vmatpush1.msra.mxu0 %v571
      %652 = vmatprep.subr.mxu0 0.0
      %653 = vmatpush1.msra.mxu0 %v570
      %654 = vmatprep.subr.mxu0 0.0
      %655 = vmatpush1.msra.mxu0 %v569
      %656 = vmatprep.subr.mxu0 0.0
      %657 = vmatpush1.msra.mxu0 %v568
      %658 = vmatprep.subr.mxu0 0.0
      %659 = vmatpush1.msra.mxu0 %v567
      %660 = vmatprep.subr.mxu0 0.0
      %661 = vmatpush1.msra.mxu0 %v566
      %662 = vmatprep.subr.mxu0 0.0
      %663 = vmatpush2.msra.mxu0 0.0
      %664 = vmatprep.subr.mxu0 0.0
      %665 = vmatpush2.msra.mxu0 0.0
      %666 = vmatprep.subr.mxu0 0.0
      %667 = vmatpush2.msra.mxu0 0.0
      %668 = vmatprep.subr.mxu0 0.0
      %669 = vmatpush2.msra.mxu0 0.0
      %670 = vmatprep.subr.mxu0 0.0
      %671 = vmatpush2.msra.mxu0 0.0
      %672 = vmatprep.subr.mxu0 0.0
      %673 = vmatpush2.msra.mxu0 0.0
      %674 = vmatprep.subr.mxu0 0.0
      %675 = vmatpush2.msra.mxu0 0.0
      %676 = vmatprep.subr.mxu0 0.0
      %677 = vmatpush2.msra.mxu0 0.0
      %678 = vmatprep.subr.mxu0 0.0
      %679 = vmatpush2.msra.mxu0 0.0
      %680 = vmatprep.subr.mxu0 0.0
      %681 = vmatpush2.msra.mxu0 0.0
      %682 = vmatprep.subr.mxu0 0.0
      %683 = vmatpush2.msra.mxu0 0.0
      %684 = vmatprep.subr.mxu0 0.0
      %685 = vmatpush2.msra.mxu0 0.0
      %686 = vmatprep.subr.mxu0 0.0
      %687 = vmatpush2.msra.mxu0 0.0
      %688 = vmatprep.subr.mxu0 0.0
      %689 = vmatpush2.msra.mxu0 0.0
      %690 = vmatprep.subr.mxu0 0.0
      %691 = vmatpush2.msra.mxu0 0.0
      %692 = vmatprep.subr.mxu0 0.0
      %693 = vmatpush2.msra.mxu0 0.0
      %694 = vmatprep.mubr.f32.mxu0 0.0
      %695 = vmatmul.mubr.f32.gmra.mxu0 %v583
      %v696 = vpop.f32.mrf.mxu0
      %v697 = vadd.f32 %v579, %v696
      %v698 = vpop.f32.mrf.mxu0
      %699 = vmatprep.mubr.f32.mxu0 0.0
      %700 = vmatmul.mubr.f32.gmra.mxu0 %v586
      %v701 = vpop.f32.mrf.mxu0
      %v702 = vadd.f32 %v579, %v701
      %v703 = vpop.f32.mrf.mxu0
      %704 = vmatprep.mubr.f32.mxu0 0.0
      %705 = vmatmul.mubr.f32.gmra.mxu0 %v589
      %v706 = vpop.f32.mrf.mxu0
      %v707 = vadd.f32 %v579, %v706
      %v708 = vpop.f32.mrf.mxu0
      %709 = vmatprep.mubr.f32.mxu0 0.0
      %710 = vmatmul.mubr.f32.gmra.mxu0 %v592
      %v711 = vpop.f32.mrf.mxu0
      %v712 = vadd.f32 %v579, %v711
      %v713 = vpop.f32.mrf.mxu0
      %714 = vmatprep.mubr.f32.mxu0 0.0
      %715 = vmatmul.mubr.f32.gmra.mxu0 %v595
      %v716 = vpop.f32.mrf.mxu0
      %v717 = vadd.f32 %v579, %v716
      %v718 = vpop.f32.mrf.mxu0
      %719 = vmatprep.mubr.f32.mxu0 0.0
      %720 = vmatmul.mubr.f32.gmra.mxu0 %v598
      %v721 = vpop.f32.mrf.mxu0
      %v722 = vadd.f32 %v579, %v721
      %v723 = vpop.f32.mrf.mxu0
      %724 = vmatprep.mubr.f32.mxu0 0.0
      %725 = vmatmul.mubr.f32.gmra.mxu0 %v601
      %v726 = vpop.f32.mrf.mxu0
      %v727 = vadd.f32 %v579, %v726
      %v728 = vpop.f32.mrf.mxu0
      %729 = vmatprep.mubr.f32.mxu0 0.0
      %730 = vmatmul.mubr.f32.gmra.mxu0 %v604
      %v731 = vpop.f32.mrf.mxu0
      %v732 = vadd.f32 %v579, %v731
      %v733 = vpop.f32.mrf.mxu0
      %734 = vmatprep.mubr.f32.mxu0 0.0
      %735 = vmatmul.mubr.f32.gmra.mxu0 %v607
      %v736 = vpop.f32.mrf.mxu0
      %v737 = vadd.f32 %v579, %v736
      %v738 = vpop.f32.mrf.mxu0
      %739 = vmatprep.mubr.f32.mxu0 0.0
      %740 = vmatmul.mubr.f32.gmra.mxu0 %v610
      %v741 = vpop.f32.mrf.mxu0
      %v742 = vadd.f32 %v579, %v741
      %v743 = vpop.f32.mrf.mxu0
      %744 = vmatprep.mubr.f32.mxu0 0.0
      %745 = vmatmul.mubr.f32.gmra.mxu0 %v613
      %v746 = vpop.f32.mrf.mxu0
      %v747 = vadd.f32 %v579, %v746
      %v748 = vpop.f32.mrf.mxu0
      %749 = vmatprep.mubr.f32.mxu0 0.0
      %750 = vmatmul.mubr.f32.gmra.mxu0 %v616
      %v751 = vpop.f32.mrf.mxu0
      %v752 = vadd.f32 %v579, %v751
      %v753 = vpop.f32.mrf.mxu0
      %754 = vmatprep.mubr.f32.mxu0 0.0
      %755 = vmatmul.mubr.f32.gmra.mxu0 %v619
      %v756 = vpop.f32.mrf.mxu0
      %v757 = vadd.f32 %v579, %v756
      %v758 = vpop.f32.mrf.mxu0
      %759 = vmatprep.mubr.f32.mxu0 0.0
      %760 = vmatmul.mubr.f32.gmra.mxu0 %v622
      %v761 = vpop.f32.mrf.mxu0
      %v762 = vadd.f32 %v579, %v761
      %v763 = vpop.f32.mrf.mxu0
      %764 = vmatprep.mubr.f32.mxu0 0.0
      %765 = vmatmul.mubr.f32.gmra.mxu0 %v625
      %v766 = vpop.f32.mrf.mxu0
      %v767 = vadd.f32 %v579, %v766
      %v768 = vpop.f32.mrf.mxu0
      %769 = vmatprep.mubr.f32.mxu0 0.0
      %770 = vmatmul.mubr.f32.gmra.mxu0 %v628
      %v771 = vpop.f32.mrf.mxu0
      %v772 = vadd.f32 %v579, %v771
      %v773 = vpop.f32.mrf.mxu0
      %774 = vdwg.mxu0
      %v775 = vmax.f32 %v697, 0.0
      %v776 = vmax.f32 %v702, 0.0
      %v777 = vmax.f32 %v707, 0.0
      %v778 = vmax.f32 %v712, 0.0
      %v779 = vmax.f32 %v717, 0.0
      %v780 = vmax.f32 %v722, 0.0
      %v781 = vmax.f32 %v727, 0.0
      %v782 = vmax.f32 %v732, 0.0
      %v783 = vmax.f32 %v737, 0.0
      %v784 = vmax.f32 %v742, 0.0
      %v785 = vmax.f32 %v747, 0.0
      %v786 = vmax.f32 %v752, 0.0
      %v787 = vmax.f32 %v757, 0.0
      %v788 = vmax.f32 %v762, 0.0
      %v789 = vmax.f32 %v767, 0.0
      %v790 = vmax.f32 %v772, 0.0
      %v791 = vld [vmem:[%s6] sm:$0xff]
      %v792 = vld [vmem:[%s6 + $0x8] sm:$0xff]
      %v793 = vld [vmem:[%s6 + $0x10] sm:$0xff]
      %v794 = vld [vmem:[%s6 + $0x18] sm:$0xff]
      %v795 = vld [vmem:[%s7] sm:$0x1]
      %v797 = vlaneseq
      %v798 = vshrl.u32 %v797, 7
      %v799 = vsub.s32 0, %v798
      %v800 = vrot.slane %v795, %v799
      %vm802 = vcmask 261120
      %v804 = vsel %vm802, %v775, 0
      %v807 = vsel %vm802, %v776, 0
      %v810 = vsel %vm802, %v777, 0
      %v813 = vsel %vm802, %v778, 0
      %v816 = vsel %vm802, %v779, 0
      %v819 = vsel %vm802, %v780, 0
      %v822 = vsel %vm802, %v781, 0
      %v825 = vsel %vm802, %v782, 0
      %v828 = vsel %vm802, %v783, 0
      %v831 = vsel %vm802, %v784, 0
      %v834 = vsel %vm802, %v785, 0
      %v837 = vsel %vm802, %v786, 0
      %v840 = vsel %vm802, %v787, 0
      %v843 = vsel %vm802, %v788, 0
      %v846 = vsel %vm802, %v789, 0
      %v849 = vsel %vm802, %v790, 0
      %851 = vmatprep.subr.mxu0 0.0
      %852 = vmatpush1.msra.mxu0 0.0
      %853 = vmatprep.subr.mxu0 0.0
      %854 = vmatpush1.msra.mxu0 0.0
      %855 = vmatprep.subr.mxu0 0.0
      %856 = vmatpush1.msra.mxu0 0.0
      %857 = vmatprep.subr.mxu0 0.0
      %858 = vmatpush1.msra.mxu0 0.0
      %859 = vmatprep.subr.mxu0 0.0
      %860 = vmatpush1.msra.mxu0 0.0
      %861 = vmatprep.subr.mxu0 0.0
      %862 = vmatpush1.msra.mxu0 0.0
      %863 = vmatprep.subr.mxu0 0.0
      %864 = vmatpush1.msra.mxu0 0.0
      %865 = vmatprep.subr.mxu0 0.0
      %866 = vmatpush1.msra.mxu0 0.0
      %867 = vmatprep.subr.mxu0 0.0
      %868 = vmatpush1.msra.mxu0 0.0
      %869 = vmatprep.subr.mxu0 0.0
      %870 = vmatpush1.msra.mxu0 0.0
      %871 = vmatprep.subr.mxu0 0.0
      %872 = vmatpush1.msra.mxu0 0.0
      %873 = vmatprep.subr.mxu0 0.0
      %874 = vmatpush1.msra.mxu0 0.0
      %875 = vmatprep.subr.mxu0 0.0
      %876 = vmatpush1.msra.mxu0 %v794
      %877 = vmatprep.subr.mxu0 0.0
      %878 = vmatpush1.msra.mxu0 %v793
      %879 = vmatprep.subr.mxu0 0.0
      %880 = vmatpush1.msra.mxu0 %v792
      %881 = vmatprep.subr.mxu0 0.0
      %882 = vmatpush1.msra.mxu0 %v791
      %883 = vmatprep.subr.mxu0 0.0
      %884 = vmatpush2.msra.mxu0 0.0
      %885 = vmatprep.subr.mxu0 0.0
      %886 = vmatpush2.msra.mxu0 0.0
      %887 = vmatprep.subr.mxu0 0.0
      %888 = vmatpush2.msra.mxu0 0.0
      %889 = vmatprep.subr.mxu0 0.0
      %890 = vmatpush2.msra.mxu0 0.0
      %891 = vmatprep.subr.mxu0 0.0
      %892 = vmatpush2.msra.mxu0 0.0
      %893 = vmatprep.subr.mxu0 0.0
      %894 = vmatpush2.msra.mxu0 0.0
      %895 = vmatprep.subr.mxu0 0.0
      %896 = vmatpush2.msra.mxu0 0.0
      %897 = vmatprep.subr.mxu0 0.0
      %898 = vmatpush2.msra.mxu0 0.0
      %899 = vmatprep.subr.mxu0 0.0
      %900 = vmatpush2.msra.mxu0 0.0
      %901 = vmatprep.subr.mxu0 0.0
      %902 = vmatpush2.msra.mxu0 0.0
      %903 = vmatprep.subr.mxu0 0.0
      %904 = vmatpush2.msra.mxu0 0.0
      %905 = vmatprep.subr.mxu0 0.0
      %906 = vmatpush2.msra.mxu0 0.0
      %907 = vmatprep.subr.mxu0 0.0
      %908 = vmatpush2.msra.mxu0 0.0
      %909 = vmatprep.subr.mxu0 0.0
      %910 = vmatpush2.msra.mxu0 0.0
      %911 = vmatprep.subr.mxu0 0.0
      %912 = vmatpush2.msra.mxu0 0.0
      %913 = vmatprep.subr.mxu0 0.0
      %914 = vmatpush2.msra.mxu0 0.0
      %915 = vmatprep.mubr.f32.mxu0 0.0
      %916 = vmatmul.mubr.f32.gmra.mxu0 %v804
      %v917 = vpop.f32.mrf.mxu0
      %v918 = vadd.f32 %v800, %v917
      %v919 = vpop.f32.mrf.mxu0
      %920 = vmatprep.mubr.f32.mxu0 0.0
      %921 = vmatmul.mubr.f32.gmra.mxu0 %v807
      %v922 = vpop.f32.mrf.mxu0
      %v923 = vadd.f32 %v800, %v922
      %v924 = vpop.f32.mrf.mxu0
      %925 = vmatprep.mubr.f32.mxu0 0.0
      %926 = vmatmul.mubr.f32.gmra.mxu0 %v810
      %v927 = vpop.f32.mrf.mxu0
      %v928 = vadd.f32 %v800, %v927
      %v929 = vpop.f32.mrf.mxu0
      %930 = vmatprep.mubr.f32.mxu0 0.0
      %931 = vmatmul.mubr.f32.gmra.mxu0 %v813
      %v932 = vpop.f32.mrf.mxu0
      %v933 = vadd.f32 %v800, %v932
      %v934 = vpop.f32.mrf.mxu0
      %935 = vmatprep.mubr.f32.mxu0 0.0
      %936 = vmatmul.mubr.f32.gmra.mxu0 %v816
      %v937 = vpop.f32.mrf.mxu0
      %v938 = vadd.f32 %v800, %v937
      %v939 = vpop.f32.mrf.mxu0
      %940 = vmatprep.mubr.f32.mxu0 0.0
      %941 = vmatmul.mubr.f32.gmra.mxu0 %v819
      %v942 = vpop.f32.mrf.mxu0
      %v943 = vadd.f32 %v800, %v942
      %v944 = vpop.f32.mrf.mxu0
      %945 = vmatprep.mubr.f32.mxu0 0.0
      %946 = vmatmul.mubr.f32.gmra.mxu0 %v822
      %v947 = vpop.f32.mrf.mxu0
      %v948 = vadd.f32 %v800, %v947
      %v949 = vpop.f32.mrf.mxu0
      %950 = vmatprep.mubr.f32.mxu0 0.0
      %951 = vmatmul.mubr.f32.gmra.mxu0 %v825
      %v952 = vpop.f32.mrf.mxu0
      %v953 = vadd.f32 %v800, %v952
      %v954 = vpop.f32.mrf.mxu0
      %955 = vmatprep.mubr.f32.mxu0 0.0
      %956 = vmatmul.mubr.f32.gmra.mxu0 %v828
      %v957 = vpop.f32.mrf.mxu0
      %v958 = vadd.f32 %v800, %v957
      %v959 = vpop.f32.mrf.mxu0
      %960 = vmatprep.mubr.f32.mxu0 0.0
      %961 = vmatmul.mubr.f32.gmra.mxu0 %v831
      %v962 = vpop.f32.mrf.mxu0
      %v963 = vadd.f32 %v800, %v962
      %v964 = vpop.f32.mrf.mxu0
      %965 = vmatprep.mubr.f32.mxu0 0.0
      %966 = vmatmul.mubr.f32.gmra.mxu0 %v834
      %v967 = vpop.f32.mrf.mxu0
      %v968 = vadd.f32 %v800, %v967
      %v969 = vpop.f32.mrf.mxu0
      %970 = vmatprep.mubr.f32.mxu0 0.0
      %971 = vmatmul.mubr.f32.gmra.mxu0 %v837
      %v972 = vpop.f32.mrf.mxu0
      %v973 = vadd.f32 %v800, %v972
      %v974 = vpop.f32.mrf.mxu0
      %975 = vmatprep.mubr.f32.mxu0 0.0
      %976 = vmatmul.mubr.f32.gmra.mxu0 %v840
      %v977 = vpop.f32.mrf.mxu0
      %v978 = vadd.f32 %v800, %v977
      %v979 = vpop.f32.mrf.mxu0
      %980 = vmatprep.mubr.f32.mxu0 0.0
      %981 = vmatmul.mubr.f32.gmra.mxu0 %v843
      %v982 = vpop.f32.mrf.mxu0
      %v983 = vadd.f32 %v800, %v982
      %v984 = vpop.f32.mrf.mxu0
      %985 = vmatprep.mubr.f32.mxu0 0.0
      %986 = vmatmul.mubr.f32.gmra.mxu0 %v846
      %v987 = vpop.f32.mrf.mxu0
      %v988 = vadd.f32 %v800, %v987
      %v989 = vpop.f32.mrf.mxu0
      %990 = vmatprep.mubr.f32.mxu0 0.0
      %991 = vmatmul.mubr.f32.gmra.mxu0 %v849
      %v992 = vpop.f32.mrf.mxu0
      %v993 = vadd.f32 %v800, %v992
      %v994 = vpop.f32.mrf.mxu0
      %995 = vdwg.mxu0
      %v996 = vlaneseq
      %v997 = vand.u32 %v996, 127
      %vm998 = vcmp.eq.s32.totalorder %v997, 4
      %v999 = vsel %vm998, %v918, 0.0
      %v1000 = vsel %vm998, %v923, 0.0
      %v1001 = vsel %vm998, %v928, 0.0
      %v1002 = vsel %vm998, %v933, 0.0
      %v1003 = vsel %vm998, %v938, 0.0
      %v1004 = vsel %vm998, %v943, 0.0
      %v1005 = vsel %vm998, %v948, 0.0
      %v1006 = vsel %vm998, %v953, 0.0
      %v1007 = vsel %vm998, %v958, 0.0
      %v1008 = vsel %vm998, %v963, 0.0
      %v1009 = vsel %vm998, %v968, 0.0
      %v1010 = vsel %vm998, %v973, 0.0
      %v1011 = vsel %vm998, %v978, 0.0
      %v1012 = vsel %vm998, %v983, 0.0
      %v1013 = vsel %vm998, %v988, 0.0
      %v1014 = vsel %vm998, %v993, 0.0
      %vm1015 = vcmask 39936
      %v1016 = vsel %vm1015, %v999, 0.0
      %1017 = vadd.xlane.f32.xlu0 %v1016
      %v1018 = vpop.xlane.xlu0 %1017
      %v1019 = vsel %vm1015, %v1000, 0.0
      %1020 = vadd.xlane.f32.xlu0 %v1019
      %v1021 = vpop.xlane.xlu0 %1020
      %v1022 = vsel %vm1015, %v1001, 0.0
      %1023 = vadd.xlane.f32.xlu0 %v1022
      %v1024 = vpop.xlane.xlu0 %1023
      %v1025 = vsel %vm1015, %v1002, 0.0
      %1026 = vadd.xlane.f32.xlu0 %v1025
      %v1027 = vpop.xlane.xlu0 %1026
      %v1028 = vsel %vm1015, %v1003, 0.0
      %1029 = vadd.xlane.f32.xlu0 %v1028
      %v1030 = vpop.xlane.xlu0 %1029
      %v1031 = vsel %vm1015, %v1004, 0.0
      %1032 = vadd.xlane.f32.xlu0 %v1031
      %v1033 = vpop.xlane.xlu0 %1032
      %v1034 = vsel %vm1015, %v1005, 0.0
      %1035 = vadd.xlane.f32.xlu0 %v1034
      %v1036 = vpop.xlane.xlu0 %1035
      %v1037 = vsel %vm1015, %v1006, 0.0
      %1038 = vadd.xlane.f32.xlu0 %v1037
      %v1039 = vpop.xlane.xlu0 %1038
      %v1040 = vsel %vm1015, %v1007, 0.0
      %1041 = vadd.xlane.f32.xlu0 %v1040
      %v1042 = vpop.xlane.xlu0 %1041
      %v1043 = vsel %vm1015, %v1008, 0.0
      %1044 = vadd.xlane.f32.xlu0 %v1043
      %v1045 = vpop.xlane.xlu0 %1044
      %v1046 = vsel %vm1015, %v1009, 0.0
      %1047 = vadd.xlane.f32.xlu0 %v1046
      %v1048 = vpop.xlane.xlu0 %1047
      %v1049 = vsel %vm1015, %v1010, 0.0
      %1050 = vadd.xlane.f32.xlu0 %v1049
      %v1051 = vpop.xlane.xlu0 %1050
      %v1052 = vsel %vm1015, %v1011, 0.0
      %1053 = vadd.xlane.f32.xlu0 %v1052
      %v1054 = vpop.xlane.xlu0 %1053
      %v1055 = vsel %vm1015, %v1012, 0.0
      %1056 = vadd.xlane.f32.xlu0 %v1055
      %v1057 = vpop.xlane.xlu0 %1056
      %v1058 = vsel %vm1015, %v1013, 0.0
      %1059 = vadd.xlane.f32.xlu0 %v1058
      %v1060 = vpop.xlane.xlu0 %1059
      %v1061 = vsel %vm1015, %v1014, 0.0
      %1062 = vadd.xlane.f32.xlu0 %v1061
      %v1063 = vpop.xlane.xlu0 %1062
      %vm1064 = vcmask 31744
      %v1065 = vsel %vm1064, %v918, 0.0
      %1066 = vadd.xlane.f32.xlu0 %v1065
      %v1067 = vpop.xlane.xlu0 %1066
      %v1068 = vsel %vm1064, %v923, 0.0
      %1069 = vadd.xlane.f32.xlu0 %v1068
      %v1070 = vpop.xlane.xlu0 %1069
      %v1071 = vsel %vm1064, %v928, 0.0
      %1072 = vadd.xlane.f32.xlu0 %v1071
      %v1073 = vpop.xlane.xlu0 %1072
      %v1074 = vsel %vm1064, %v933, 0.0
      %1075 = vadd.xlane.f32.xlu0 %v1074
      %v1076 = vpop.xlane.xlu0 %1075
      %v1077 = vsel %vm1064, %v938, 0.0
      %1078 = vadd.xlane.f32.xlu0 %v1077
      %v1079 = vpop.xlane.xlu0 %1078
      %v1080 = vsel %vm1064, %v943, 0.0
      %1081 = vadd.xlane.f32.xlu0 %v1080
      %v1082 = vpop.xlane.xlu0 %1081
      %v1083 = vsel %vm1064, %v948, 0.0
      %1084 = vadd.xlane.f32.xlu0 %v1083
      %v1085 = vpop.xlane.xlu0 %1084
      %v1086 = vsel %vm1064, %v953, 0.0
      %1087 = vadd.xlane.f32.xlu0 %v1086
      %v1088 = vpop.xlane.xlu0 %1087
      %v1089 = vsel %vm1064, %v958, 0.0
      %1090 = vadd.xlane.f32.xlu0 %v1089
      %v1091 = vpop.xlane.xlu0 %1090
      %v1092 = vsel %vm1064, %v963, 0.0
      %1093 = vadd.xlane.f32.xlu0 %v1092
      %v1094 = vpop.xlane.xlu0 %1093
      %v1095 = vsel %vm1064, %v968, 0.0
      %1096 = vadd.xlane.f32.xlu0 %v1095
      %v1097 = vpop.xlane.xlu0 %1096
      %v1098 = vsel %vm1064, %v973, 0.0
      %1099 = vadd.xlane.f32.xlu0 %v1098
      %v1100 = vpop.xlane.xlu0 %1099
      %v1101 = vsel %vm1064, %v978, 0.0
      %1102 = vadd.xlane.f32.xlu0 %v1101
      %v1103 = vpop.xlane.xlu0 %1102
      %v1104 = vsel %vm1064, %v983, 0.0
      %1105 = vadd.xlane.f32.xlu0 %v1104
      %v1106 = vpop.xlane.xlu0 %1105
      %v1107 = vsel %vm1064, %v988, 0.0
      %1108 = vadd.xlane.f32.xlu0 %v1107
      %v1109 = vpop.xlane.xlu0 %1108
      %v1110 = vsel %vm1064, %v993, 0.0
      %1111 = vadd.xlane.f32.xlu0 %v1110
      %v1112 = vpop.xlane.xlu0 %1111
      %v1113 = vrcp.pop 4.0
      %v1114 = vmul.f32 %v1067, %v1113
      %v1115 = vmul.f32 %v1070, %v1113
      %v1116 = vmul.f32 %v1073, %v1113
      %v1117 = vmul.f32 %v1076, %v1113
      %v1118 = vmul.f32 %v1079, %v1113
      %v1119 = vmul.f32 %v1082, %v1113
      %v1120 = vmul.f32 %v1085, %v1113
      %v1121 = vmul.f32 %v1088, %v1113
      %v1122 = vmul.f32 %v1091, %v1113
      %v1123 = vmul.f32 %v1094, %v1113
      %v1124 = vmul.f32 %v1097, %v1113
      %v1125 = vmul.f32 %v1100, %v1113
      %v1126 = vmul.f32 %v1103, %v1113
      %v1127 = vmul.f32 %v1106, %v1113
      %v1128 = vmul.f32 %v1109, %v1113
      %v1129 = vmul.f32 %v1112, %v1113
      %v1130 = vld [vmem:[%s323] sm:$0xff]
      %v1131 = vld [vmem:[%s323 + $0x8] sm:$0xff]
      %v1132 = vld [vmem:[%s323 + $0x10] sm:$0xff]
      %v1133 = vld [vmem:[%s323 + $0x18] sm:$0xff]
      %v1134 = vld [vmem:[%s323 + $0x20] sm:$0xff]
      %v1135 = vld [vmem:[%s323 + $0x28] sm:$0xff]
      %v1136 = vld [vmem:[%s323 + $0x30] sm:$0xff]
      %v1137 = vld [vmem:[%s323 + $0x38] sm:$0xff]
      %v1138 = vld [vmem:[%s323 + $0x40] sm:$0xff]
      %v1139 = vld [vmem:[%s323 + $0x48] sm:$0xff]
      %v1140 = vld [vmem:[%s323 + $0x50] sm:$0xff]
      %v1141 = vld [vmem:[%s323 + $0x58] sm:$0xff]
      %v1142 = vld [vmem:[%s323 + $0x60] sm:$0xff]
      %v1143 = vld [vmem:[%s323 + $0x68] sm:$0xff]
      %v1144 = vld [vmem:[%s323 + $0x70] sm:$0xff]
      %v1145 = vld [vmem:[%s323 + $0x78] sm:$0xff]
      %v1146 = vmul.f32 %v918, %v1130
      %v1147 = vmul.f32 %v923, %v1131
      %v1148 = vmul.f32 %v928, %v1132
      %v1149 = vmul.f32 %v933, %v1133
      %v1150 = vmul.f32 %v938, %v1134
      %v1151 = vmul.f32 %v943, %v1135
      %v1152 = vmul.f32 %v948, %v1136
      %v1153 = vmul.f32 %v953, %v1137
      %v1154 = vmul.f32 %v958, %v1138
      %v1155 = vmul.f32 %v963, %v1139
      %v1156 = vmul.f32 %v968, %v1140
      %v1157 = vmul.f32 %v973, %v1141
      %v1158 = vmul.f32 %v978, %v1142
      %v1159 = vmul.f32 %v983, %v1143
      %v1160 = vmul.f32 %v988, %v1144
      %v1161 = vmul.f32 %v993, %v1145
      %v1162 = vsel %vm1064, %v1146, 0.0
      %1163 = vadd.xlane.f32.xlu0 %v1162
      %v1164 = vpop.xlane.xlu0 %1163
      %v1165 = vsel %vm1064, %v1147, 0.0
      %1166 = vadd.xlane.f32.xlu0 %v1165
      %v1167 = vpop.xlane.xlu0 %1166
      %v1168 = vsel %vm1064, %v1148, 0.0
      %1169 = vadd.xlane.f32.xlu0 %v1168
      %v1170 = vpop.xlane.xlu0 %1169
      %v1171 = vsel %vm1064, %v1149, 0.0
      %1172 = vadd.xlane.f32.xlu0 %v1171
      %v1173 = vpop.xlane.xlu0 %1172
      %v1174 = vsel %vm1064, %v1150, 0.0
      %1175 = vadd.xlane.f32.xlu0 %v1174
      %v1176 = vpop.xlane.xlu0 %1175
      %v1177 = vsel %vm1064, %v1151, 0.0
      %1178 = vadd.xlane.f32.xlu0 %v1177
      %v1179 = vpop.xlane.xlu0 %1178
      %v1180 = vsel %vm1064, %v1152, 0.0
      %1181 = vadd.xlane.f32.xlu0 %v1180
      %v1182 = vpop.xlane.xlu0 %1181
      %v1183 = vsel %vm1064, %v1153, 0.0
      %1184 = vadd.xlane.f32.xlu0 %v1183
      %v1185 = vpop.xlane.xlu0 %1184
      %v1186 = vsel %vm1064, %v1154, 0.0
      %1187 = vadd.xlane.f32.xlu0 %v1186
      %v1188 = vpop.xlane.xlu0 %1187
      %v1189 = vsel %vm1064, %v1155, 0.0
      %1190 = vadd.xlane.f32.xlu0 %v1189
      %v1191 = vpop.xlane.xlu0 %1190
      %v1192 = vsel %vm1064, %v1156, 0.0
      %1193 = vadd.xlane.f32.xlu0 %v1192
      %v1194 = vpop.xlane.xlu0 %1193
      %v1195 = vsel %vm1064, %v1157, 0.0
      %1196 = vadd.xlane.f32.xlu0 %v1195
      %v1197 = vpop.xlane.xlu0 %1196
      %v1198 = vsel %vm1064, %v1158, 0.0
      %1199 = vadd.xlane.f32.xlu0 %v1198
      %v1200 = vpop.xlane.xlu0 %1199
      %v1201 = vsel %vm1064, %v1159, 0.0
      %1202 = vadd.xlane.f32.xlu0 %v1201
      %v1203 = vpop.xlane.xlu0 %1202
      %v1204 = vsel %vm1064, %v1160, 0.0
      %1205 = vadd.xlane.f32.xlu0 %v1204
      %v1206 = vpop.xlane.xlu0 %1205
      %v1207 = vsel %vm1064, %v1161, 0.0
      %1208 = vadd.xlane.f32.xlu0 %v1207
      %v1209 = vpop.xlane.xlu0 %1208
      %v1210 = vsel %vm1064, %v1130, 0.0
      %1211 = vadd.xlane.f32.xlu0 %v1210
      %v1212 = vpop.xlane.xlu0 %1211
      %v1213 = vsel %vm1064, %v1131, 0.0
      %1214 = vadd.xlane.f32.xlu0 %v1213
      %v1215 = vpop.xlane.xlu0 %1214
      %v1216 = vsel %vm1064, %v1132, 0.0
      %1217 = vadd.xlane.f32.xlu0 %v1216
      %v1218 = vpop.xlane.xlu0 %1217
      %v1219 = vsel %vm1064, %v1133, 0.0
      %1220 = vadd.xlane.f32.xlu0 %v1219
      %v1221 = vpop.xlane.xlu0 %1220
      %v1222 = vsel %vm1064, %v1134, 0.0
      %1223 = vadd.xlane.f32.xlu0 %v1222
      %v1224 = vpop.xlane.xlu0 %1223
      %v1225 = vsel %vm1064, %v1135, 0.0
      %1226 = vadd.xlane.f32.xlu0 %v1225
      %v1227 = vpop.xlane.xlu0 %1226
      %v1228 = vsel %vm1064, %v1136, 0.0
      %1229 = vadd.xlane.f32.xlu0 %v1228
      %v1230 = vpop.xlane.xlu0 %1229
      %v1231 = vsel %vm1064, %v1137, 0.0
      %1232 = vadd.xlane.f32.xlu0 %v1231
      %v1233 = vpop.xlane.xlu0 %1232
      %v1234 = vsel %vm1064, %v1138, 0.0
      %1235 = vadd.xlane.f32.xlu0 %v1234
      %v1236 = vpop.xlane.xlu0 %1235
      %v1237 = vsel %vm1064, %v1139, 0.0
      %1238 = vadd.xlane.f32.xlu0 %v1237
      %v1239 = vpop.xlane.xlu0 %1238
      %v1240 = vsel %vm1064, %v1140, 0.0
      %1241 = vadd.xlane.f32.xlu0 %v1240
      %v1242 = vpop.xlane.xlu0 %1241
      %v1243 = vsel %vm1064, %v1141, 0.0
      %1244 = vadd.xlane.f32.xlu0 %v1243
      %v1245 = vpop.xlane.xlu0 %1244
      %v1246 = vsel %vm1064, %v1142, 0.0
      %1247 = vadd.xlane.f32.xlu0 %v1246
      %v1248 = vpop.xlane.xlu0 %1247
      %v1249 = vsel %vm1064, %v1143, 0.0
      %1250 = vadd.xlane.f32.xlu0 %v1249
      %v1251 = vpop.xlane.xlu0 %1250
      %v1252 = vsel %vm1064, %v1144, 0.0
      %1253 = vadd.xlane.f32.xlu0 %v1252
      %v1254 = vpop.xlane.xlu0 %1253
      %v1255 = vsel %vm1064, %v1145, 0.0
      %1256 = vadd.xlane.f32.xlu0 %v1255
      %v1257 = vpop.xlane.xlu0 %1256
      %v1258 = vsub.f32 %v1018, %v1114
      %v1259 = vsub.f32 %v1021, %v1115
      %v1260 = vsub.f32 %v1024, %v1116
      %v1261 = vsub.f32 %v1027, %v1117
      %v1262 = vsub.f32 %v1030, %v1118
      %v1263 = vsub.f32 %v1033, %v1119
      %v1264 = vsub.f32 %v1036, %v1120
      %v1265 = vsub.f32 %v1039, %v1121
      %v1266 = vsub.f32 %v1042, %v1122
      %v1267 = vsub.f32 %v1045, %v1123
      %v1268 = vsub.f32 %v1048, %v1124
      %v1269 = vsub.f32 %v1051, %v1125
      %v1270 = vsub.f32 %v1054, %v1126
      %v1271 = vsub.f32 %v1057, %v1127
      %v1272 = vsub.f32 %v1060, %v1128
      %v1273 = vsub.f32 %v1063, %v1129
      %v1274 = vmul.f32 %v1258, %v1212
      %v1275 = vmul.f32 %v1259, %v1215
      %v1276 = vmul.f32 %v1260, %v1218
      %v1277 = vmul.f32 %v1261, %v1221
      %v1278 = vmul.f32 %v1262, %v1224
      %v1279 = vmul.f32 %v1263, %v1227
      %v1280 = vmul.f32 %v1264, %v1230
      %v1281 = vmul.f32 %v1265, %v1233
      %v1282 = vmul.f32 %v1266, %v1236
      %v1283 = vmul.f32 %v1267, %v1239
      %v1284 = vmul.f32 %v1268, %v1242
      %v1285 = vmul.f32 %v1269, %v1245
      %v1286 = vmul.f32 %v1270, %v1248
      %v1287 = vmul.f32 %v1271, %v1251
      %v1288 = vmul.f32 %v1272, %v1254
      %v1289 = vmul.f32 %v1273, %v1257
      %v1290 = vadd.f32 %v1164, %v1274
      %v1291 = vadd.f32 %v1167, %v1275
      %v1292 = vadd.f32 %v1170, %v1276
      %v1293 = vadd.f32 %v1173, %v1277
      %v1294 = vadd.f32 %v1176, %v1278
      %v1295 = vadd.f32 %v1179, %v1279
      %v1296 = vadd.f32 %v1182, %v1280
      %v1297 = vadd.f32 %v1185, %v1281
      %v1298 = vadd.f32 %v1188, %v1282
      %v1299 = vadd.f32 %v1191, %v1283
      %v1300 = vadd.f32 %v1194, %v1284
      %v1301 = vadd.f32 %v1197, %v1285
      %v1302 = vadd.f32 %v1200, %v1286
      %v1303 = vadd.f32 %v1203, %v1287
      %v1304 = vadd.f32 %v1206, %v1288
      %v1305 = vadd.f32 %v1209, %v1289
      %vm1306 = vcmask 7168
      %1307 = vst.msk [vmem:[%s329] sm:$0xff] %vm1306, %v1290
      %1308 = vst.msk [vmem:[%s329 + $0x8] sm:$0xff] %vm1306, %v1291
      %1309 = vst.msk [vmem:[%s329 + $0x10] sm:$0xff] %vm1306, %v1292
      %1310 = vst.msk [vmem:[%s329 + $0x18] sm:$0xff] %vm1306, %v1293
      %1311 = vst.msk [vmem:[%s329 + $0x20] sm:$0xff] %vm1306, %v1294
      %1312 = vst.msk [vmem:[%s329 + $0x28] sm:$0xff] %vm1306, %v1295
      %1313 = vst.msk [vmem:[%s329 + $0x30] sm:$0xff] %vm1306, %v1296
      %1314 = vst.msk [vmem:[%s329 + $0x38] sm:$0xff] %vm1306, %v1297
      %1315 = vst.msk [vmem:[%s329 + $0x40] sm:$0xff] %vm1306, %v1298
      %1316 = vst.msk [vmem:[%s329 + $0x48] sm:$0xff] %vm1306, %v1299
      %1317 = vst.msk [vmem:[%s329 + $0x50] sm:$0xff] %vm1306, %v1300
      %1318 = vst.msk [vmem:[%s329 + $0x58] sm:$0xff] %vm1306, %v1301
      %1319 = vst.msk [vmem:[%s329 + $0x60] sm:$0xff] %vm1306, %v1302
      %1320 = vst.msk [vmem:[%s329 + $0x68] sm:$0xff] %vm1306, %v1303
      %1321 = vst.msk [vmem:[%s329 + $0x70] sm:$0xff] %vm1306, %v1304
      %1322 = vst.msk [vmem:[%s329 + $0x78] sm:$0xff] %vm1306, %v1305
      %s1323 = smul.u32 16, %s19
      %p1324 = scmp.lt.s32.totalorder %s1323, 31
      %s1325 = scalar_select %p1324, %s1323, 31
      %s1326 = smul.addr %s1325, 8
      %s1327 = scalar_lea.vmem %s8, %s1326
      // Predicated region
      $region53: #{tpu_custom_call.1} parent=51 // pred_check
        %p1328 = pneg %p215
      $region54: #{tpu_custom_call.1} parent=51 // pred_check_branch
        %1330 = sbr.rel (%p1328) target = $region56
      $region55: #{tpu_custom_call.1} parent=51 // pred_region
        %s1331 = smul.u32 16, %s19
      $region56: #{tpu_custom_call.1} parent=51 // pred_fallthru
        _
    $region52: #{tpu_custom_call.1} parent=5 // pred_fallthru
      _
    %p1332 = scmp.le.s32.totalorder 2, %s14
    // Predicated region
    $region57: #{tpu_custom_call.1} parent=5 // pred_check
      %p1333 = pneg %p1332
    $region58: #{tpu_custom_call.1} parent=5 // pred_check_branch
      %1335 = sbr.rel (%p1333) target = $region60
    $region59: #{tpu_custom_call.1} parent=5 // pred_region
      %s1336 = ssub.s32 %s14, 2
      // Predicated region
      $region61: #{tpu_custom_call.1} parent=59 // pred_check
        %p1337 = pneg %p221
      $region62: #{tpu_custom_call.1} parent=59 // pred_check_branch
        %1339 = sbr.rel (%p1337) target = $region64
      $region63: #{tpu_custom_call.1} parent=59 // pred_region
        %s1340 = smul.u32 16, %s20
        %p1341 = scmp.lt.s32.totalorder %s1340, 31
        %s1342 = scalar_select %p1341, %s1340, 31
        %s1343 = smul.addr %s1342, 8
        %s1344 = scalar_lea.vmem %s8, %s1343
      $region64: #{tpu_custom_call.1} parent=59 // pred_fallthru
        _
    $region60: #{tpu_custom_call.1} parent=5 // pred_fallthru
      _
  $region6: #{tpu_custom_call.1} parent=0 // loop_footer
    %s18 = sadd.s32 1, %s14
  $region7: #{tpu_custom_call.1} parent=0 // loop_footer_branch
    %13 = sbr.rel target = $region3
  $region8: #{tpu_custom_call.1} parent=0 // loop_exit
    _

</llo_original>
